<compile_context>
chip_gen: v6e
topology: v6e:2x2x1
jax: 0.10.0
libtpu: 0.0.40
codegen_flags: <defaults>
</compile_context>

<pallas_src>
import functools
import math

import jax
import jax.numpy as jnp
from jax.experimental import pallas as pl
from jax.experimental.pallas import tpu as pltpu

OUT_PAD = 128  # lane-dense output width (>= 2 * out_dim)


def _round_up(n, m):
    return (n + m - 1) // m * m


# ---------------------------------------------------------------------------
# One-time parameter packing (hoisted out of the per-forward-call path).
# ---------------------------------------------------------------------------
def pack_params(params):
    """Pack all parameters into two VMEM-friendly slabs. Call once per task."""
    w1, b1, w2, b2, wm, bm, wv, bv, max_lv, min_lv = params
    in_dim, h1 = w1.shape
    h2 = w2.shape[1]
    out_dim = wm.shape[1]
    assert 2 * out_dim <= OUT_PAD

    r_w1 = 0
    r_w2 = r_w1 + _round_up(in_dim, 8)
    r_wh = r_w2 + _round_up(h1, 8)
    n_rows = r_wh + _round_up(h2, 8)

    # weight slab: each weight matrix at an 8-aligned row offset, 128 lanes
    wslab = jnp.zeros((n_rows, OUT_PAD), jnp.float32)
    wslab = wslab.at[r_w1:r_w1 + in_dim, :h1].set(w1)
    wslab = wslab.at[r_w2:r_w2 + h1, :h2].set(w2)
    wslab = wslab.at[r_wh:r_wh + h2, :out_dim].set(wm)           # mean head
    wslab = wslab.at[r_wh:r_wh + h2, out_dim:2 * out_dim].set(wv)  # logvar head

    # vector slab: biases, clamp vectors and the logvar-lane mask
    vslab = jnp.zeros((8, OUT_PAD), jnp.float32)
    vslab = vslab.at[0, :h1].set(b1.reshape(-1))
    vslab = vslab.at[1, :h2].set(b2.reshape(-1))
    vslab = vslab.at[2, :out_dim].set(bm.reshape(-1))
    vslab = vslab.at[2, out_dim:2 * out_dim].set(bv.reshape(-1))
    vslab = vslab.at[3, out_dim:2 * out_dim].set(max_lv.reshape(-1))
    vslab = vslab.at[4, out_dim:2 * out_dim].set(min_lv.reshape(-1))
    vslab = vslab.at[5, out_dim:2 * out_dim].set(1.0)  # logvar lane mask

    meta = dict(in_dim=in_dim, h1=h1, h2=h2, out_dim=out_dim,
                r_w1=r_w1, r_w2=r_w2, r_wh=r_wh)
    return wslab, vslab, meta


# ---------------------------------------------------------------------------
# Pallas kernel: full forward pass for one batch tile.
# ---------------------------------------------------------------------------
def baseline_kernel(xa_ref, wslab_ref, vslab_ref, out_ref, *,
                    in_dim, h1, h2, out_dim, r_w1, r_w2, r_wh, out_w):
    xa = xa_ref[...]

    # static ref slices into the packed slabs (free)
    w1 = wslab_ref[r_w1:r_w1 + in_dim, 0:h1]
    w2 = wslab_ref[r_w2:r_w2 + h1, 0:h2]
    wh = wslab_ref[r_wh:r_wh + h2, 0:out_w]

    b1 = vslab_ref[0:1, 0:h1]
    b2 = vslab_ref[1:2, 0:h2]
    bh = vslab_ref[2:3, 0:out_w]
    max_lv = vslab_ref[3:4, 0:out_w]
    min_lv = vslab_ref[4:5, 0:out_w]
    lv_mask = vslab_ref[5:6, 0:out_w]

    # hidden MLP: (Linear + ReLU) x 2
    h = jnp.maximum(jnp.dot(xa, w1, preferred_element_type=jnp.float32) + b1, 0.0)
    phi = jnp.maximum(jnp.dot(h, w2, preferred_element_type=jnp.float32) + b2, 0.0)

    # fused heads: lanes [0, out_dim) = mean, [out_dim, 2*out_dim) = logvar,
    # any remaining lanes are zero padding (sliced off in the wrapper).
    y = jnp.dot(phi, wh, preferred_element_type=jnp.float32) + bh

    # soft clamp, selected onto the logvar lanes via the precomputed mask
    clamped = max_lv - jax.nn.softplus(max_lv - y)
    clamped = min_lv + jax.nn.softplus(clamped - min_lv)
    out_ref[...] = jnp.where(lv_mask != 0.0, clamped, y)


# ---------------------------------------------------------------------------
# Wrapper: batch tiling + pallas_call. Parameters arrive pre-packed.
# ---------------------------------------------------------------------------
def baseline_forward(x, a, wslab, vslab, meta, *, tile_b=None, wide_out=None):
    B = x.shape[0]
    out_dim = meta['out_dim']

    # concat once in the wrapper (cheap XLA op), not per grid step
    xa = jnp.concatenate([x, a], axis=-1).astype(jnp.float32)
    in_dim = xa.shape[1]
    assert in_dim == meta['in_dim']

    # batch tiling: single grid step for small B (latency path); 2048-row
    # tiles for big B, falling back to 1024 so grid_n is even (v7x: 2 TCs).
    if tile_b is None:
        if B <= 1024:
            tile_b = B
        else:
            tile_b = 2048
            if pl.cdiv(B, tile_b) % 2 == 1 and pl.cdiv(B, 1024) % 2 == 0:
                tile_b = 1024
    tile_b = min(tile_b, B)
    grid_n = pl.cdiv(B, tile_b)
    if grid_n > 1:
        assert tile_b % 8 == 0, "multi-step grids need sublane-aligned tiles"
    B_pad = grid_n * tile_b
    if B_pad != B:
        xa = jnp.pad(xa, ((0, B_pad - B), (0, 0)))

    # small-B: 128-lane unmasked store + wrapper slice (latency path).
    # large-B: narrow (2*out_dim) store to minimize HBM writeback bytes.
    if wide_out is None:
        wide_out = grid_n == 1
    out_w = OUT_PAD if wide_out else 2 * out_dim

    kernel = functools.partial(baseline_kernel, out_w=out_w, **meta)

    out = pl.pallas_call(
        kernel,
        out_shape=jax.ShapeDtypeStruct((B_pad, out_w), jnp.float32),
        grid=(grid_n,),
        in_specs=[
            pl.BlockSpec((tile_b, in_dim), lambda i: (i, 0)),
            pl.BlockSpec(wslab.shape, lambda i: (0, 0)),
            pl.BlockSpec(vslab.shape, lambda i: (0, 0)),
        ],
        out_specs=pl.BlockSpec((tile_b, out_w), lambda i: (i, 0)),
        compiler_params=pltpu.CompilerParams(
            dimension_semantics=("parallel",)),
    )(xa, wslab, vslab)

    return out[:B, :2 * out_dim]


# ---------------------------------------------------------------------------
# Deterministic parameter init (PyTorch Linear-style uniform bounds).
# ---------------------------------------------------------------------------
def init_linear(key, in_dim, out_dim):
    kw, kb = jax.random.split(key)
    bound = 1.0 / math.sqrt(in_dim)
    w = jax.random.uniform(kw, (in_dim, out_dim), jnp.float32, -bound, bound)
    b = jax.random.uniform(kb, (1, out_dim), jnp.float32, -bound, bound)
    return w, b


def pure_jax_reference(x, a, params):
    w1, b1, w2, b2, wm, bm, wv, bv, max_lv, min_lv = params
    xa = jnp.concatenate([x, a], axis=-1)
    h1 = jax.nn.relu(xa @ w1 + b1)
    phi = jax.nn.relu(h1 @ w2 + b2)
    mean = phi @ wm + bm
    logvar = phi @ wv + bv
    logvar = max_lv - jax.nn.softplus(max_lv - logvar)
    logvar = min_lv + jax.nn.softplus(logvar - min_lv)
    return jnp.concatenate([mean, logvar], axis=-1)


if __name__ == "__main__":
    # small shapes consistent with the module
    B = 16            # batch
    x_dim = 12        # hparams.state_dim
    a_dim = 4         # hparams.control_dim
    hidden = [32, 32] # hparams.hidden_layers
    out_dim = 12      # hparams.out_dim  (out_var=True, out_func=None)
    # TODO(synk): hparams.out_func is an arbitrary Python callable; assumed None.

    key = jax.random.PRNGKey(0)
    kx, ka, k1, k2, km, kv = jax.random.split(key, 6)

    x = jax.random.normal(kx, (B, x_dim), jnp.float32)
    a = jax.random.normal(ka, (B, a_dim), jnp.float32)

    w1, b1 = init_linear(k1, x_dim + a_dim, hidden[0])
    w2, b2 = init_linear(k2, hidden[0], hidden[1])
    wm, bm = init_linear(km, hidden[1], out_dim)
    wv, bv = init_linear(kv, hidden[1], out_dim)
    max_lv = jnp.ones((1, out_dim), jnp.float32) / 2.0     # max_logvar_{task_id}
    min_lv = -jnp.ones((1, out_dim), jnp.float32) * 10.0   # min_logvar_{task_id}

    params = (w1, b1, w2, b2, wm, bm, wv, bv, max_lv, min_lv)

    # pack once (outside the hot forward path)
    wslab, vslab, meta = pack_params(params)

    ref = pure_jax_reference(x, a, params)

    # small-B latency path: single grid step, lane-dense 128-wide store
    out_wide = baseline_forward(x, a, wslab, vslab, meta)
    out_wide = jax.block_until_ready(out_wide)
    assert out_wide.shape == (B, 2 * out_dim)
    assert jnp.allclose(out_wide, ref, atol=1e-5, rtol=1e-5), "wide path mismatch"

    # multi-tile throughput path: narrow (2*out_dim) stores, 2 grid steps
    out_narrow = baseline_forward(x, a, wslab, vslab, meta, tile_b=8, wide_out=False)
    out_narrow = jax.block_until_ready(out_narrow)
    assert out_narrow.shape == (B, 2 * out_dim)
    assert jnp.allclose(out_narrow, ref, atol=1e-5, rtol=1e-5), "narrow path mismatch"

    print("KERNEL_OK")
</pallas_src>

<mosaic_0001>
module attributes {stable_mosaic.version = 11 : i64} {
  func.func @baseline_kernel(%arg0: i32, %arg1: memref<16x16xf32, #tpu.memory_space<vmem>>, %arg2: memref<80x128xf32, #tpu.memory_space<vmem>>, %arg3: memref<8x128xf32, #tpu.memory_space<vmem>>, %arg4: memref<16x128xf32, #tpu.memory_space<vmem>>) attributes {dimension_semantics = [#tpu.dimension_semantics<parallel>], iteration_bounds = array<i64: 1>, scalar_prefetch = 0 : i64, scratch_operands = 0 : i64, tpu.core_type = #tpu.core_type<tc>, window_params = [{transform_indices = @transform_0, window_bounds = array<i64: 16, 16>}, {pipeline_mode = #tpu.pipeline_mode<synchronous>, transform_indices = @transform_1, window_bounds = array<i64: 80, 128>}, {pipeline_mode = #tpu.pipeline_mode<synchronous>, transform_indices = @transform_2, window_bounds = array<i64: 8, 128>}, {transform_indices = @transform_3, window_bounds = array<i64: 16, 128>}]} {
    %c0 = arith.constant 0 : index
    %c0_0 = arith.constant 0 : index
    %0 = vector.load %arg1[%c0, %c0_0] : memref<16x16xf32, #tpu.memory_space<vmem>>, vector<16x16xf32>
    %c0_1 = arith.constant 0 : index
    %c0_2 = arith.constant 0 : index
    %1 = vector.load %arg2[%c0_1, %c0_2] : memref<80x128xf32, #tpu.memory_space<vmem>>, vector<16x32xf32>
    %c16 = arith.constant 16 : index
    %c0_3 = arith.constant 0 : index
    %2 = vector.load %arg2[%c16, %c0_3] : memref<80x128xf32, #tpu.memory_space<vmem>>, vector<32x32xf32>
    %c48 = arith.constant 48 : index
    %c0_4 = arith.constant 0 : index
    %3 = vector.load %arg2[%c48, %c0_4] : memref<80x128xf32, #tpu.memory_space<vmem>>, vector<32x128xf32>
    %c0_5 = arith.constant 0 : index
    %c0_6 = arith.constant 0 : index
    %4 = vector.load %arg3[%c0_5, %c0_6] : memref<8x128xf32, #tpu.memory_space<vmem>>, vector<1x32xf32>
    %c1 = arith.constant 1 : index
    %c0_7 = arith.constant 0 : index
    %5 = vector.load %arg3[%c1, %c0_7] : memref<8x128xf32, #tpu.memory_space<vmem>>, vector<1x32xf32>
    %c2 = arith.constant 2 : index
    %c0_8 = arith.constant 0 : index
    %6 = vector.load %arg3[%c2, %c0_8] : memref<8x128xf32, #tpu.memory_space<vmem>>, vector<1x128xf32>
    %c3 = arith.constant 3 : index
    %c0_9 = arith.constant 0 : index
    %7 = vector.load %arg3[%c3, %c0_9] : memref<8x128xf32, #tpu.memory_space<vmem>>, vector<1x128xf32>
    %c4 = arith.constant 4 : index
    %c0_10 = arith.constant 0 : index
    %8 = vector.load %arg3[%c4, %c0_10] : memref<8x128xf32, #tpu.memory_space<vmem>>, vector<1x128xf32>
    %c5 = arith.constant 5 : index
    %c0_11 = arith.constant 0 : index
    %9 = vector.load %arg3[%c5, %c0_11] : memref<8x128xf32, #tpu.memory_space<vmem>>, vector<1x128xf32>
    %cst = arith.constant dense<0.000000e+00> : vector<16x32xf32>
    %10 = tpu.matmul %0, %1, %cst {dimension_numbers = #tpu.dot_dimension_numbers<[1], [0], [0], [1], [0, 0, 1, 1], [], []>} : vector<16x16xf32>, vector<16x32xf32>, vector<16x32xf32> -> vector<16x32xf32>
    %11 = vector.broadcast %4 : vector<1x32xf32> to vector<16x32xf32>
    %12 = arith.addf %10, %11 : vector<16x32xf32>
    %cst_12 = arith.constant 0.000000e+00 : f32
    %13 = vector.broadcast %cst_12 : f32 to vector<16x32xf32>
    %14 = arith.maximumf %12, %13 : vector<16x32xf32>
    %cst_13 = arith.constant dense<0.000000e+00> : vector<16x32xf32>
    %15 = tpu.matmul %14, %2, %cst_13 {dimension_numbers = #tpu.dot_dimension_numbers<[1], [0], [0], [1], [0, 0, 1, 1], [], []>} : vector<16x32xf32>, vector<32x32xf32>, vector<16x32xf32> -> vector<16x32xf32>
    %16 = vector.broadcast %5 : vector<1x32xf32> to vector<16x32xf32>
    %17 = arith.addf %15, %16 : vector<16x32xf32>
    %cst_14 = arith.constant 0.000000e+00 : f32
    %18 = vector.broadcast %cst_14 : f32 to vector<16x32xf32>
    %19 = arith.maximumf %17, %18 : vector<16x32xf32>
    %cst_15 = arith.constant dense<0.000000e+00> : vector<16x128xf32>
    %20 = tpu.matmul %19, %3, %cst_15 {dimension_numbers = #tpu.dot_dimension_numbers<[1], [0], [0], [1], [0, 0, 1, 1], [], []>} : vector<16x32xf32>, vector<32x128xf32>, vector<16x128xf32> -> vector<16x128xf32>
    %21 = vector.broadcast %6 : vector<1x128xf32> to vector<16x128xf32>
    %22 = arith.addf %20, %21 : vector<16x128xf32>
    %23 = vector.broadcast %7 : vector<1x128xf32> to vector<16x128xf32>
    %24 = arith.subf %23, %22 : vector<16x128xf32>
    %cst_16 = arith.constant 0.000000e+00 : f32
    %25 = vector.broadcast %cst_16 : f32 to vector<16x128xf32>
    %26 = arith.maximumf %24, %25 : vector<16x128xf32>
    %27 = vector.broadcast %cst_16 : f32 to vector<16x128xf32>
    %28 = arith.subf %24, %27 : vector<16x128xf32>
    %29 = arith.cmpf one, %28, %28 : vector<16x128xf32>
    %30 = vector.broadcast %cst_16 : f32 to vector<16x128xf32>
    %31 = arith.addf %24, %30 : vector<16x128xf32>
    %32 = math.absf %28 : vector<16x128xf32>
    %cst_17 = arith.constant 0.000000e+00 : f32
    %33 = vector.broadcast %cst_17 : f32 to vector<16x128xf32>
    %34 = arith.subf %33, %32 : vector<16x128xf32>
    %35 = math.exp %34 : vector<16x128xf32>
    %36 = math.log1p %35 : vector<16x128xf32>
    %37 = arith.addf %26, %36 : vector<16x128xf32>
    %38 = arith.select %29, %31, %37 : vector<16x128xi1>, vector<16x128xf32>
    %39 = vector.broadcast %7 : vector<1x128xf32> to vector<16x128xf32>
    %40 = arith.subf %39, %38 : vector<16x128xf32>
    %41 = vector.broadcast %8 : vector<1x128xf32> to vector<16x128xf32>
    %42 = arith.subf %40, %41 : vector<16x128xf32>
    %cst_18 = arith.constant 0.000000e+00 : f32
    %43 = vector.broadcast %cst_18 : f32 to vector<16x128xf32>
    %44 = arith.maximumf %42, %43 : vector<16x128xf32>
    %45 = vector.broadcast %cst_18 : f32 to vector<16x128xf32>
    %46 = arith.subf %42, %45 : vector<16x128xf32>
    %47 = arith.cmpf one, %46, %46 : vector<16x128xf32>
    %48 = vector.broadcast %cst_18 : f32 to vector<16x128xf32>
    %49 = arith.addf %42, %48 : vector<16x128xf32>
    %50 = math.absf %46 : vector<16x128xf32>
    %cst_19 = arith.constant 0.000000e+00 : f32
    %51 = vector.broadcast %cst_19 : f32 to vector<16x128xf32>
    %52 = arith.subf %51, %50 : vector<16x128xf32>
    %53 = math.exp %52 : vector<16x128xf32>
    %54 = math.log1p %53 : vector<16x128xf32>
    %55 = arith.addf %44, %54 : vector<16x128xf32>
    %56 = arith.select %47, %49, %55 : vector<16x128xi1>, vector<16x128xf32>
    %57 = vector.broadcast %8 : vector<1x128xf32> to vector<16x128xf32>
    %58 = arith.addf %57, %56 : vector<16x128xf32>
    %cst_20 = arith.constant 0.000000e+00 : f32
    %59 = vector.broadcast %cst_20 : f32 to vector<1x128xf32>
    %60 = arith.cmpf one, %9, %59 : vector<1x128xf32>
    %61 = vector.shape_cast %60 : vector<1x128xi1> to vector<1x128xi1>
    %62 = vector.broadcast %61 : vector<1x128xi1> to vector<16x128xi1>
    %63 = arith.select %62, %58, %22 : vector<16x128xi1>, vector<16x128xf32>
    %c0_21 = arith.constant 0 : index
    %c0_22 = arith.constant 0 : index
    %64 = vector.load %arg4[%c0_21, %c0_22] : memref<16x128xf32, #tpu.memory_space<vmem>>, vector<16x128xf32>
    tpu.vector_store %arg4[%c0_21, %c0_22], %63 {strides = array<i32>} : memref<16x128xf32, #tpu.memory_space<vmem>>, vector<16x128xf32>,
    return
  }
  func.func @transform_0(%arg0: i32) -> (i32, i32) {
    %c0_i32 = arith.constant 0 : i32
    %c0_i32_0 = arith.constant 0 : i32
    return %arg0, %c0_i32 : i32, i32
  }
  func.func @transform_1(%arg0: i32) -> (i32, i32) {
    %c0_i32 = arith.constant 0 : i32
    %c0_i32_0 = arith.constant 0 : i32
    %c0_i32_1 = arith.constant 0 : i32
    return %c0_i32, %c0_i32_0 : i32, i32
  }
  func.func @transform_2(%arg0: i32) -> (i32, i32) {
    %c0_i32 = arith.constant 0 : i32
    %c0_i32_0 = arith.constant 0 : i32
    %c0_i32_1 = arith.constant 0 : i32
    return %c0_i32, %c0_i32_0 : i32, i32
  }
  func.func @transform_3(%arg0: i32) -> (i32, i32) {
    %c0_i32 = arith.constant 0 : i32
    %c0_i32_0 = arith.constant 0 : i32
    return %arg0, %c0_i32 : i32, i32
  }
}

</mosaic_0001>

<llo_original>
// kernel: tpu_custom_call.1
$region0: #{tpu_custom_call.1}
  #allocation0 [shape = 'u32[]', space=smem, size = 0x4, offset = 0x4, fixed_abs, tag = 'smem constant byte address 0x4 - core index']
  #allocation1 [shape = 'u32[144,128]{1,0:T(1,128)}', space=vmem, size = 0x12000, scoped, tag = 'internal scratch']
  %s0 = inlined_call_operand.hbm [shape: f32[16,16], index: 0, kind: input, shape index: {}]
  %s1 = inlined_call_operand.hbm [shape: f32[80,128], index: 1, kind: input, shape index: {}]
  %s2 = inlined_call_operand.hbm [shape: f32[8,128], index: 2, kind: input, shape index: {}]
  %s3 = inlined_call_operand.hbm [shape: f32[16,128], index: 3, kind: output, shape index: {}]
  %s4 = sld [smem:[#allocation0]]
  $region34: #{tpu_custom_call.1} parent=0
    _
  %s6 = ssub.s32 1, %s4
  %s7 = scalar_select 0, %s6, %s4
  $region1: #{tpu_custom_call.1} parent=0
    #allocation2 [shape = 'u8[8192]{0}', space=vmem, size = 0x2000, scoped, tag = 'input window, operand 0, single buffered']
    #allocation3 [shape = 's32[1]{0}', space=sflag, size = 0x4, scoped, tag = 'scoped memory for tpu_custom_call.1']
    #allocation4 [shape = 's32[1]{0}', space=sflag, size = 0x4, scoped, tag = 'scoped memory for tpu_custom_call.1']
    #allocation5 [shape = 'u8[40960]{0}', space=vmem, size = 0xa000, scoped, tag = 'input window, operand 1, single buffered']
    #allocation6 [shape = 's32[1]{0}', space=sflag, size = 0x4, scoped, tag = 'scoped memory for tpu_custom_call.1']
    #allocation7 [shape = 'u8[4096]{0}', space=vmem, size = 0x1000, scoped, tag = 'input window, operand 2, single buffered']
    #allocation8 [shape = 'u8[8192]{0}', space=vmem, size = 0x2000, scoped, tag = 'output window, operand 0, single buffered']
    %8 = vsyncpa [#allocation3], 0
    %9 = vsyncpa [#allocation6], 0
    %10 = vsyncpa [#allocation4], 0
    // Predicated region
    $region2: #{tpu_custom_call.1} parent=1 // pred_check
      _
    $region3: #{tpu_custom_call.1} parent=1 // pred_check_branch
      %12 = sbr.rel (0) target = $region5
    $region4: #{tpu_custom_call.1} parent=1 // pred_region
      %s14 = ssub.s32 256, 256
      %15 = vsyncadd [#allocation3], %s14
      %s16 = sshll.u32 [#allocation2], 4
      %s17 = int_to_ptr.vmem [resolvable:$true] %s16
      %22 = dma.hbm_to_vmem [thread:$0]  %s0, 256, %s17, [#allocation3], 128, 128, 8
    $region5: #{tpu_custom_call.1} parent=1 // pred_fallthru
      _
    // Predicated region
    $region6: #{tpu_custom_call.1} parent=1 // pred_check
      _
    $region7: #{tpu_custom_call.1} parent=1 // pred_check_branch
      %24 = sbr.rel (0) target = $region9
    $region8: #{tpu_custom_call.1} parent=1 // pred_region
      %s26 = ssub.s32 1280, 1280
      %27 = vsyncadd [#allocation6], %s26
      %s28 = sshll.u32 [#allocation5], 4
      %s29 = int_to_ptr.vmem [resolvable:$true] %s28
      %34 = dma.hbm_to_vmem [thread:$0]  %s1, 1280, %s29, [#allocation6], 128, 128, 8
    $region9: #{tpu_custom_call.1} parent=1 // pred_fallthru
      _
    // Predicated region
    $region10: #{tpu_custom_call.1} parent=1 // pred_check
      _
    $region11: #{tpu_custom_call.1} parent=1 // pred_check_branch
      %36 = sbr.rel (0) target = $region13
    $region12: #{tpu_custom_call.1} parent=1 // pred_region
      %s38 = ssub.s32 128, 128
      %39 = vsyncadd [#allocation6], %s38
      %s41 = sshll.u32 [#allocation7], 4
      %s42 = int_to_ptr.vmem [resolvable:$true] %s41
      %44 = dma.hbm_to_vmem [thread:$0]  %s2, 128, %s42, [#allocation6]
    $region13: #{tpu_custom_call.1} parent=1 // pred_fallthru
      _
    // Predicated region
    $region14: #{tpu_custom_call.1} parent=1 // pred_check
      _
    $region15: #{tpu_custom_call.1} parent=1 // pred_check_branch
      %46 = sbr.rel (0) target = $region17
    $region16: #{tpu_custom_call.1} parent=1 // pred_region
      %47 = dma.done [#allocation3], 256
    $region17: #{tpu_custom_call.1} parent=1 // pred_fallthru
      _
    // Predicated region
    $region18: #{tpu_custom_call.1} parent=1 // pred_check
      _
    $region19: #{tpu_custom_call.1} parent=1 // pred_check_branch
      %49 = sbr.rel (0) target = $region21
    $region20: #{tpu_custom_call.1} parent=1 // pred_region
      %50 = dma.done [#allocation6], 1280
    $region21: #{tpu_custom_call.1} parent=1 // pred_fallthru
      _
    // Predicated region
    $region22: #{tpu_custom_call.1} parent=1 // pred_check
      _
    $region23: #{tpu_custom_call.1} parent=1 // pred_check_branch
      %52 = sbr.rel (0) target = $region25
    $region24: #{tpu_custom_call.1} parent=1 // pred_region
      %53 = dma.done [#allocation6], 128
    $region25: #{tpu_custom_call.1} parent=1 // pred_fallthru
      _
    %v54 = vld [vmem:[#allocation2] sm:$0xff]
    %v55 = vld [vmem:[#allocation2 + $0x8] sm:$0xff]
    %v56 = vld [vmem:[#allocation5] sm:$0xff]
    %v57 = vld [vmem:[#allocation5 + $0x8] sm:$0xff]
    %v58 = vld [vmem:[#allocation5 + $0x10] sm:$0xff]
    %v59 = vld [vmem:[#allocation5 + $0x18] sm:$0xff]
    %v60 = vld [vmem:[#allocation5 + $0x20] sm:$0xff]
    %v61 = vld [vmem:[#allocation5 + $0x28] sm:$0xff]
    %v62 = vld [vmem:[#allocation5 + $0x30] sm:$0xff]
    %v63 = vld [vmem:[#allocation5 + $0x38] sm:$0xff]
    %v64 = vld [vmem:[#allocation5 + $0x40] sm:$0xff]
    %v65 = vld [vmem:[#allocation5 + $0x48] sm:$0xff]
    %v66 = vld [vmem:[#allocation7] sm:$0x1]
    %v67 = vld [vmem:[#allocation7 + $0x1] sm:$0x1]
    %v68 = vld [vmem:[#allocation7 + $0x2] sm:$0x1]
    %v69 = vld [vmem:[#allocation7 + $0x3] sm:$0x1]
    %v70 = vld [vmem:[#allocation7 + $0x4] sm:$0x1]
    %v71 = vld [vmem:[#allocation7 + $0x5] sm:$0x1]
    %v72 = vlaneseq
    %v73 = vshrl.u32 %v72, 7
    %v74 = vsub.s32 0, %v73
    %v75 = vrot.slane %v66, %v74
    %vm76 = vcmask 130048
    %v78 = vsel %vm76, %v54, 0
    %v81 = vsel %vm76, %v55, 0
    %83 = vmatprep.subr.mxu0 0.0
    %84 = vmatpush1.msra.mxu0 0.0
    %85 = vmatprep.subr.mxu0 0.0
    %86 = vmatpush1.msra.mxu0 0.0
    %87 = vmatprep.subr.mxu0 0.0
    %88 = vmatpush1.msra.mxu0 0.0
    %89 = vmatprep.subr.mxu0 0.0
    %90 = vmatpush1.msra.mxu0 0.0
    %91 = vmatprep.subr.mxu0 0.0
    %92 = vmatpush1.msra.mxu0 0.0
    %93 = vmatprep.subr.mxu0 0.0
    %94 = vmatpush1.msra.mxu0 0.0
    %95 = vmatprep.subr.mxu0 0.0
    %96 = vmatpush1.msra.mxu0 0.0
    %97 = vmatprep.subr.mxu0 0.0
    %98 = vmatpush1.msra.mxu0 0.0
    %99 = vmatprep.subr.mxu0 0.0
    %100 = vmatpush1.msra.mxu0 0.0
    %101 = vmatprep.subr.mxu0 0.0
    %102 = vmatpush1.msra.mxu0 0.0
    %103 = vmatprep.subr.mxu0 0.0
    %104 = vmatpush1.msra.mxu0 0.0
    %105 = vmatprep.subr.mxu0 0.0
    %106 = vmatpush1.msra.mxu0 0.0
    %107 = vmatprep.subr.mxu0 0.0
    %108 = vmatpush1.msra.mxu0 0.0
    %109 = vmatprep.subr.mxu0 0.0
    %110 = vmatpush1.msra.mxu0 0.0
    %111 = vmatprep.subr.mxu0 0.0
    %112 = vmatpush1.msra.mxu0 %v57
    %113 = vmatprep.subr.mxu0 0.0
    %114 = vmatpush1.msra.mxu0 %v56
    %115 = vmatprep.subr.mxu0 0.0
    %116 = vmatpush2.msra.mxu0 0.0
    %117 = vmatprep.subr.mxu0 0.0
    %118 = vmatpush2.msra.mxu0 0.0
    %119 = vmatprep.subr.mxu0 0.0
    %120 = vmatpush2.msra.mxu0 0.0
    %121 = vmatprep.subr.mxu0 0.0
    %122 = vmatpush2.msra.mxu0 0.0
    %123 = vmatprep.subr.mxu0 0.0
    %124 = vmatpush2.msra.mxu0 0.0
    %125 = vmatprep.subr.mxu0 0.0
    %126 = vmatpush2.msra.mxu0 0.0
    %127 = vmatprep.subr.mxu0 0.0
    %128 = vmatpush2.msra.mxu0 0.0
    %129 = vmatprep.subr.mxu0 0.0
    %130 = vmatpush2.msra.mxu0 0.0
    %131 = vmatprep.subr.mxu0 0.0
    %132 = vmatpush2.msra.mxu0 0.0
    %133 = vmatprep.subr.mxu0 0.0
    %134 = vmatpush2.msra.mxu0 0.0
    %135 = vmatprep.subr.mxu0 0.0
    %136 = vmatpush2.msra.mxu0 0.0
    %137 = vmatprep.subr.mxu0 0.0
    %138 = vmatpush2.msra.mxu0 0.0
    %139 = vmatprep.subr.mxu0 0.0
    %140 = vmatpush2.msra.mxu0 0.0
    %141 = vmatprep.subr.mxu0 0.0
    %142 = vmatpush2.msra.mxu0 0.0
    %143 = vmatprep.subr.mxu0 0.0
    %144 = vmatpush2.msra.mxu0 0.0
    %145 = vmatprep.subr.mxu0 0.0
    %146 = vmatpush2.msra.mxu0 0.0
    %147 = vmatprep.mubr.f32.mxu0 0.0
    %148 = vmatmul.mubr.f32.gmra.mxu0 %v78
    %v149 = vpop.f32.mrf.mxu0
    %v150 = vadd.f32 %v75, %v149
    %v151 = vpop.f32.mrf.mxu0
    %152 = vmatprep.mubr.f32.mxu0 0.0
    %153 = vmatmul.mubr.f32.gmra.mxu0 %v81
    %v154 = vpop.f32.mrf.mxu0
    %v155 = vadd.f32 %v75, %v154
    %v156 = vpop.f32.mrf.mxu0
    %157 = vdwg.mxu0
    %v158 = vmax.f32 %v150, 0.0
    %v159 = vmax.f32 %v155, 0.0
    %v160 = vlaneseq
    %v161 = vshrl.u32 %v160, 7
    %v162 = vsub.s32 0, %v161
    %v163 = vrot.slane %v67, %v162
    %vm164 = vcmask 261120
    %v166 = vsel %vm164, %v158, 0
    %v169 = vsel %vm164, %v159, 0
    %171 = vmatprep.subr.mxu0 0.0
    %172 = vmatpush1.msra.mxu0 0.0
    %173 = vmatprep.subr.mxu0 0.0
    %174 = vmatpush1.msra.mxu0 0.0
    %175 = vmatprep.subr.mxu0 0.0
    %176 = vmatpush1.msra.mxu0 0.0
    %177 = vmatprep.subr.mxu0 0.0
    %178 = vmatpush1.msra.mxu0 0.0
    %179 = vmatprep.subr.mxu0 0.0
    %180 = vmatpush1.msra.mxu0 0.0
    %181 = vmatprep.subr.mxu0 0.0
    %182 = vmatpush1.msra.mxu0 0.0
    %183 = vmatprep.subr.mxu0 0.0
    %184 = vmatpush1.msra.mxu0 0.0
    %185 = vmatprep.subr.mxu0 0.0
    %186 = vmatpush1.msra.mxu0 0.0
    %187 = vmatprep.subr.mxu0 0.0
    %188 = vmatpush1.msra.mxu0 0.0
    %189 = vmatprep.subr.mxu0 0.0
    %190 = vmatpush1.msra.mxu0 0.0
    %191 = vmatprep.subr.mxu0 0.0
    %192 = vmatpush1.msra.mxu0 0.0
    %193 = vmatprep.subr.mxu0 0.0
    %194 = vmatpush1.msra.mxu0 0.0
    %195 = vmatprep.subr.mxu0 0.0
    %196 = vmatpush1.msra.mxu0 %v61
    %197 = vmatprep.subr.mxu0 0.0
    %198 = vmatpush1.msra.mxu0 %v60
    %199 = vmatprep.subr.mxu0 0.0
    %200 = vmatpush1.msra.mxu0 %v59
    %201 = vmatprep.subr.mxu0 0.0
    %202 = vmatpush1.msra.mxu0 %v58
    %203 = vmatprep.subr.mxu0 0.0
    %204 = vmatpush2.msra.mxu0 0.0
    %205 = vmatprep.subr.mxu0 0.0
    %206 = vmatpush2.msra.mxu0 0.0
    %207 = vmatprep.subr.mxu0 0.0
    %208 = vmatpush2.msra.mxu0 0.0
    %209 = vmatprep.subr.mxu0 0.0
    %210 = vmatpush2.msra.mxu0 0.0
    %211 = vmatprep.subr.mxu0 0.0
    %212 = vmatpush2.msra.mxu0 0.0
    %213 = vmatprep.subr.mxu0 0.0
    %214 = vmatpush2.msra.mxu0 0.0
    %215 = vmatprep.subr.mxu0 0.0
    %216 = vmatpush2.msra.mxu0 0.0
    %217 = vmatprep.subr.mxu0 0.0
    %218 = vmatpush2.msra.mxu0 0.0
    %219 = vmatprep.subr.mxu0 0.0
    %220 = vmatpush2.msra.mxu0 0.0
    %221 = vmatprep.subr.mxu0 0.0
    %222 = vmatpush2.msra.mxu0 0.0
    %223 = vmatprep.subr.mxu0 0.0
    %224 = vmatpush2.msra.mxu0 0.0
    %225 = vmatprep.subr.mxu0 0.0
    %226 = vmatpush2.msra.mxu0 0.0
    %227 = vmatprep.subr.mxu0 0.0
    %228 = vmatpush2.msra.mxu0 0.0
    %229 = vmatprep.subr.mxu0 0.0
    %230 = vmatpush2.msra.mxu0 0.0
    %231 = vmatprep.subr.mxu0 0.0
    %232 = vmatpush2.msra.mxu0 0.0
    %233 = vmatprep.subr.mxu0 0.0
    %234 = vmatpush2.msra.mxu0 0.0
    %235 = vmatprep.mubr.f32.mxu0 0.0
    %236 = vmatmul.mubr.f32.gmra.mxu0 %v166
    %v237 = vpop.f32.mrf.mxu0
    %v238 = vadd.f32 %v163, %v237
    %v239 = vpop.f32.mrf.mxu0
    %240 = vmatprep.mubr.f32.mxu0 0.0
    %241 = vmatmul.mubr.f32.gmra.mxu0 %v169
    %v242 = vpop.f32.mrf.mxu0
    %v243 = vadd.f32 %v163, %v242
    %v244 = vpop.f32.mrf.mxu0
    %245 = vdwg.mxu0
    %v246 = vmax.f32 %v238, 0.0
    %v247 = vmax.f32 %v243, 0.0
    %v248 = vlaneseq
    %v249 = vshrl.u32 %v248, 7
    %v250 = vsub.s32 0, %v249
    %v251 = vrot.slane %v68, %v250
    %v253 = vsel %vm164, %v246, 0
    %v256 = vsel %vm164, %v247, 0
    %258 = vmatprep.subr.mxu0 0.0
    %259 = vmatpush1.msra.mxu0 0.0
    %260 = vmatprep.subr.mxu0 0.0
    %261 = vmatpush1.msra.mxu0 0.0
    %262 = vmatprep.subr.mxu0 0.0
    %263 = vmatpush1.msra.mxu0 0.0
    %264 = vmatprep.subr.mxu0 0.0
    %265 = vmatpush1.msra.mxu0 0.0
    %266 = vmatprep.subr.mxu0 0.0
    %267 = vmatpush1.msra.mxu0 0.0
    %268 = vmatprep.subr.mxu0 0.0
    %269 = vmatpush1.msra.mxu0 0.0
    %270 = vmatprep.subr.mxu0 0.0
    %271 = vmatpush1.msra.mxu0 0.0
    %272 = vmatprep.subr.mxu0 0.0
    %273 = vmatpush1.msra.mxu0 0.0
    %274 = vmatprep.subr.mxu0 0.0
    %275 = vmatpush1.msra.mxu0 0.0
    %276 = vmatprep.subr.mxu0 0.0
    %277 = vmatpush1.msra.mxu0 0.0
    %278 = vmatprep.subr.mxu0 0.0
    %279 = vmatpush1.msra.mxu0 0.0
    %280 = vmatprep.subr.mxu0 0.0
    %281 = vmatpush1.msra.mxu0 0.0
    %282 = vmatprep.subr.mxu0 0.0
    %283 = vmatpush1.msra.mxu0 %v65
    %284 = vmatprep.subr.mxu0 0.0
    %285 = vmatpush1.msra.mxu0 %v64
    %286 = vmatprep.subr.mxu0 0.0
    %287 = vmatpush1.msra.mxu0 %v63
    %288 = vmatprep.subr.mxu0 0.0
    %289 = vmatpush1.msra.mxu0 %v62
    %290 = vmatprep.subr.mxu0 0.0
    %291 = vmatpush2.msra.mxu0 0.0
    %292 = vmatprep.subr.mxu0 0.0
    %293 = vmatpush2.msra.mxu0 0.0
    %294 = vmatprep.subr.mxu0 0.0
    %295 = vmatpush2.msra.mxu0 0.0
    %296 = vmatprep.subr.mxu0 0.0
    %297 = vmatpush2.msra.mxu0 0.0
    %298 = vmatprep.subr.mxu0 0.0
    %299 = vmatpush2.msra.mxu0 0.0
    %300 = vmatprep.subr.mxu0 0.0
    %301 = vmatpush2.msra.mxu0 0.0
    %302 = vmatprep.subr.mxu0 0.0
    %303 = vmatpush2.msra.mxu0 0.0
    %304 = vmatprep.subr.mxu0 0.0
    %305 = vmatpush2.msra.mxu0 0.0
    %306 = vmatprep.subr.mxu0 0.0
    %307 = vmatpush2.msra.mxu0 0.0
    %308 = vmatprep.subr.mxu0 0.0
    %309 = vmatpush2.msra.mxu0 0.0
    %310 = vmatprep.subr.mxu0 0.0
    %311 = vmatpush2.msra.mxu0 0.0
    %312 = vmatprep.subr.mxu0 0.0
    %313 = vmatpush2.msra.mxu0 0.0
    %314 = vmatprep.subr.mxu0 0.0
    %315 = vmatpush2.msra.mxu0 0.0
    %316 = vmatprep.subr.mxu0 0.0
    %317 = vmatpush2.msra.mxu0 0.0
    %318 = vmatprep.subr.mxu0 0.0
    %319 = vmatpush2.msra.mxu0 0.0
    %320 = vmatprep.subr.mxu0 0.0
    %321 = vmatpush2.msra.mxu0 0.0
    %322 = vmatprep.mubr.f32.mxu0 0.0
    %323 = vmatmul.mubr.f32.gmra.mxu0 %v253
    %v324 = vpop.f32.mrf.mxu0
    %v325 = vadd.f32 %v251, %v324
    %v326 = vpop.f32.mrf.mxu0
    %327 = vmatprep.mubr.f32.mxu0 0.0
    %328 = vmatmul.mubr.f32.gmra.mxu0 %v256
    %v329 = vpop.f32.mrf.mxu0
    %v330 = vadd.f32 %v251, %v329
    %v331 = vpop.f32.mrf.mxu0
    %332 = vdwg.mxu0
    %v333 = vlaneseq
    %v334 = vshrl.u32 %v333, 7
    %v335 = vsub.s32 0, %v334
    %v336 = vrot.slane %v69, %v335
    %v337 = vsub.f32 %v336, %v325
    %v338 = vsub.f32 %v336, %v330
    %v339 = vmax.f32 %v337, 0.0
    %v340 = vmax.f32 %v338, 0.0
    %vm341 = vcmp.ne.f32.partialorder %v337, %v337
    %vm342 = vcmp.ne.f32.partialorder %v338, %v338
    %v343 = vadd.f32 %v337, 0.0
    %v344 = vadd.f32 %v338, 0.0
    %v345 = vand.u32 2147483647, %v337
    %v346 = vand.u32 2147483647, %v338
    %v347 = vsub.f32 0.0, %v345
    %v348 = vsub.f32 0.0, %v346
    %v349 = vmul.f32 %v347, 1.442695
    %v350 = vpow.pop %v349
    %v351 = vmul.f32 %v348, 1.442695
    %v352 = vpow.pop %v351
    %v353 = vadd.f32 %v350, 1.0
    %v354 = vlog2.pop %v353
    %v355 = vmul.f32 %v354, 0.6931472
    %v356 = vmul.f32 -0.5, %v350
    %v357 = vadd.f32 %v356, 1.0
    %v358 = vmul.f32 %v357, %v350
    %v359 = vand.u32 2147483647, %v350
    %vm360 = vcmp.lt.f32.partialorder %v359, 0.0004427343
    %v361 = vsel %vm360, %v358, %v355
    %v362 = vadd.f32 %v352, 1.0
    %v363 = vlog2.pop %v362
    %v364 = vmul.f32 %v363, 0.6931472
    %v365 = vmul.f32 -0.5, %v352
    %v366 = vadd.f32 %v365, 1.0
    %v367 = vmul.f32 %v366, %v352
    %v368 = vand.u32 2147483647, %v352
    %vm369 = vcmp.lt.f32.partialorder %v368, 0.0004427343
    %v370 = vsel %vm369, %v367, %v364
    %v371 = vadd.f32 %v339, %v361
    %v372 = vadd.f32 %v340, %v370
    %v373 = vsel %vm341, %v343, %v371
    %v374 = vsel %vm342, %v344, %v372
    %v375 = vsub.f32 %v336, %v373
    %v376 = vsub.f32 %v336, %v374
    %v377 = vlaneseq
    %v378 = vshrl.u32 %v377, 7
    %v379 = vsub.s32 0, %v378
    %v380 = vrot.slane %v70, %v379
    %v381 = vsub.f32 %v375, %v380
    %v382 = vsub.f32 %v376, %v380
    %v383 = vmax.f32 %v381, 0.0
    %v384 = vmax.f32 %v382, 0.0
    %vm385 = vcmp.ne.f32.partialorder %v381, %v381
    %vm386 = vcmp.ne.f32.partialorder %v382, %v382
    %v387 = vadd.f32 %v381, 0.0
    %v388 = vadd.f32 %v382, 0.0
    %v389 = vand.u32 2147483647, %v381
    %v390 = vand.u32 2147483647, %v382
    %v391 = vsub.f32 0.0, %v389
    %v392 = vsub.f32 0.0, %v390
    %v393 = vmul.f32 %v391, 1.442695
    %v394 = vpow.pop %v393
    %v395 = vmul.f32 %v392, 1.442695
    %v396 = vpow.pop %v395
    %v397 = vadd.f32 %v394, 1.0
    %v398 = vlog2.pop %v397
    %v399 = vmul.f32 %v398, 0.6931472
    %v400 = vmul.f32 -0.5, %v394
    %v401 = vadd.f32 %v400, 1.0
    %v402 = vmul.f32 %v401, %v394
    %v403 = vand.u32 2147483647, %v394
    %vm404 = vcmp.lt.f32.partialorder %v403, 0.0004427343
    %v405 = vsel %vm404, %v402, %v399
    %v406 = vadd.f32 %v396, 1.0
    %v407 = vlog2.pop %v406
    %v408 = vmul.f32 %v407, 0.6931472
    %v409 = vmul.f32 -0.5, %v396
    %v410 = vadd.f32 %v409, 1.0
    %v411 = vmul.f32 %v410, %v396
    %v412 = vand.u32 2147483647, %v396
    %vm413 = vcmp.lt.f32.partialorder %v412, 0.0004427343
    %v414 = vsel %vm413, %v411, %v408
    %v415 = vadd.f32 %v383, %v405
    %v416 = vadd.f32 %v384, %v414
    %v417 = vsel %vm385, %v387, %v415
    %v418 = vsel %vm386, %v388, %v416
    %v419 = vadd.f32 %v380, %v417
    %v420 = vadd.f32 %v380, %v418
    %vm421 = vcmp.ne.f32.partialorder %v71, 0.0
    %v422 = vsel %vm421, 1, 0
    %v423 = vlaneseq
    %v424 = vshrl.u32 %v423, 7
    %v425 = vsub.s32 0, %v424
    %v426 = vrot.slane %v422, %v425
    %vm427 = vcmp.eq.s32.totalorder %v426, 1
    %v428 = vsel %vm427, %v419, %v325
    %v429 = vsel %vm427, %v420, %v330
    %430 = vst [vmem:[#allocation8] sm:$0xff] %v428
    %431 = vst [vmem:[#allocation8 + $0x8] sm:$0xff] %v429
    // Predicated region
    $region26: #{tpu_custom_call.1} parent=1 // pred_check
      _
    $region27: #{tpu_custom_call.1} parent=1 // pred_check_branch
      %433 = sbr.rel (0) target = $region29
    $region28: #{tpu_custom_call.1} parent=1 // pred_region
      %s435 = ssub.s32 256, 256
      %436 = vsyncadd [#allocation4], %s435
      %s437 = sshll.u32 [#allocation8], 4
      %s438 = int_to_ptr.vmem [resolvable:$true] %s437
      %443 = dma.vmem_to_hbm [thread:$0]  %s438, 256, %s3, [#allocation4], 128, 128, 8
    $region29: #{tpu_custom_call.1} parent=1 // pred_fallthru
      _
    // Predicated region
    $region30: #{tpu_custom_call.1} parent=1 // pred_check
      _
    $region31: #{tpu_custom_call.1} parent=1 // pred_check_branch
      %445 = sbr.rel (0) target = $region33
    $region32: #{tpu_custom_call.1} parent=1 // pred_region
      %446 = dma.done [#allocation4], 256
    $region33: #{tpu_custom_call.1} parent=1 // pred_fallthru
      _
    %447 = vsyncpa [#allocation3], 1
    %448 = vsyncpa [#allocation6], 1
    %449 = vsyncpa [#allocation4], 1

</llo_original>
